<compile_context>
chip_gen: v7x
topology: tpu7x:2x2x1
jax: 0.10.0
libtpu: 0.0.40
codegen_flags: <defaults>
</compile_context>

<pallas_src>
import jax
import jax.numpy as jnp
from jax.experimental import pallas as pl
from jax.experimental.pallas import tpu as pltpu

LEAKY_SLOPE = 0.01   # torch.nn.LeakyReLU default negative_slope
BN_EPS = 1e-5        # torch.nn.BatchNorm2d default eps

_TAPS = tuple((dy, dx) for dy in range(3) for dx in range(3))


def _fold_bn(conv_bias, gamma, beta, running_mean, running_var):
    """Fold conv bias + eval-mode BatchNorm into per-channel scale/bias, shape (C,)."""
    scale = gamma / jnp.sqrt(running_var + BN_EPS)
    bias = beta + (conv_bias - running_mean) * scale
    return scale, bias


def _fuse_weight(w_oihw, G):
    """Torch-layout (C_out, C_in, 3, 3) weight -> (G*C_out, 9*G*C_in) block-diagonal
    tap-major matrix matching the stacked-taps operand built inside the kernel."""
    C_out, C_in = w_oihw.shape[0], w_oihw.shape[1]
    w_taps = jnp.transpose(w_oihw, (2, 3, 0, 1)).reshape(9, C_out, C_in)   # (tap, O, I)
    eye = jnp.eye(G, dtype=w_oihw.dtype)
    blocks = jax.vmap(lambda wt: jnp.kron(eye, wt))(w_taps)                # (tap, G*O, G*I)
    return jnp.transpose(blocks, (1, 0, 2)).reshape(G * C_out, 9 * G * C_in)


def _tap_masks(H, W, dtype):
    """(9, H*W) 0/1 masks: mask[t, h*W+w] == 1 iff tap t of output pixel (h, w)
    reads an in-bounds input pixel (zero padding realised by masking)."""
    hh, ww = jnp.meshgrid(jnp.arange(H), jnp.arange(W), indexing="ij")
    hh = hh.reshape(-1)
    ww = ww.reshape(-1)
    masks = []
    for dy, dx in _TAPS:
        valid = ((hh + dy - 1 >= 0) & (hh + dy - 1 < H) &
                 (ww + dx - 1 >= 0) & (ww + dx - 1 < W))
        masks.append(valid)
    return jnp.stack(masks).astype(dtype)               # (9, H*W)


def _make_kernel(W):
    def kernel(x_ref, m_ref, w0_ref, s0_ref, b0_ref, w1_ref, s1_ref, b1_ref, o_ref):
        # x_ref / o_ref: (R, P)   R = G*C image-channel planes on sublanes,
        #                         P = H*W flattened spatial extent on lanes.
        # m_ref:         (9, P)   per-tap validity masks.
        # w*_ref:        (R, 9*R) fused block-diagonal conv weight.
        # s*/b*_ref:     (R, 1)   folded conv-bias + BatchNorm scale / bias.
        masks = m_ref[...]

        def conv_block(xin, w_ref, s_ref, b_ref):
            # Stack the 9 shifted + masked reads on sublanes -> ONE matmul.
            pieces = []
            for t, (dy, dx) in enumerate(_TAPS):
                off = (dy - 1) * W + (dx - 1)               # static lane shift
                shifted = xin if off == 0 else jnp.roll(xin, -off, axis=1)
                pieces.append(shifted * masks[t:t + 1, :])  # zero out-of-bounds taps
            stacked = jnp.concatenate(pieces, axis=0)                        # (9R, P)
            y = jnp.dot(w_ref[...], stacked, preferred_element_type=jnp.float32)
            y = y * s_ref[...] + b_ref[...]                 # conv bias + BN (folded)
            y = jnp.where(y > 0.0, y, LEAKY_SLOPE * y)      # LeakyReLU
            return y + xin                                  # residual add

        x = x_ref[...].astype(jnp.float32)
        y0 = conv_block(x, w0_ref, s0_ref, b0_ref)          # conv_0(x)   + x
        y1 = conv_block(y0, w1_ref, s1_ref, b1_ref)         # conv_1(out0) + out0
        o_ref[...] = y1.astype(o_ref.dtype)

    return kernel


def residual_forward(x_nchw, params, images_per_block=None):
    """Fused forward of the PyTorch Residual module (eval-mode BatchNorm).

    x_nchw: (N, C, H, W). params: torch-layout tensors w0/w1 (C,C,3,3),
    cb0/cb1 (C,), g*/be* (C,) BN affine, m*/v* (C,) BN running stats.
    """
    N, C, H, W = x_nchw.shape
    P = H * W

    if images_per_block is None:
        # Fill the 8-sublane vreg (G*C ~ 8) and collapse the grid when possible
        # (best on single-TC v5e/v6e).  On v7x use images_per_block=1 so the
        # "parallel" grid splits across its 2 TensorCores.
        G = min(N, max(1, 8 // C))
        while N % G:
            G -= 1
    else:
        G = images_per_block
    assert N % G == 0, "images_per_block must divide the batch"
    B = N // G
    R = G * C

    s0, b0 = _fold_bn(params["cb0"], params["g0"], params["be0"], params["m0"], params["v0"])
    s1, b1 = _fold_bn(params["cb1"], params["g1"], params["be1"], params["m1"], params["v1"])
    s0 = jnp.tile(s0, G).reshape(R, 1)
    b0 = jnp.tile(b0, G).reshape(R, 1)
    s1 = jnp.tile(s1, G).reshape(R, 1)
    b1 = jnp.tile(b1, G).reshape(R, 1)
    w0 = _fuse_weight(params["w0"], G)
    w1 = _fuse_weight(params["w1"], G)
    masks = _tap_masks(H, W, jnp.float32)

    xf = x_nchw.reshape(B, R, P)       # free reshape: no transpose, no padding

    rep = lambda i: (0, 0)             # broadcast specs (weights / masks / scale / bias)
    out = pl.pallas_call(
        _make_kernel(W),
        out_shape=jax.ShapeDtypeStruct((B, R, P), x_nchw.dtype),
        grid=(B,),
        in_specs=[
            pl.BlockSpec((None, R, P), lambda i: (i, 0, 0)),   # input image group
            pl.BlockSpec((9, P), rep),                         # tap masks
            pl.BlockSpec((R, 9 * R), rep),                     # conv_0 fused weight
            pl.BlockSpec((R, 1), rep),                         # conv_0 folded scale
            pl.BlockSpec((R, 1), rep),                         # conv_0 folded bias
            pl.BlockSpec((R, 9 * R), rep),                     # conv_1 fused weight
            pl.BlockSpec((R, 1), rep),                         # conv_1 folded scale
            pl.BlockSpec((R, 1), rep),                         # conv_1 folded bias
        ],
        out_specs=pl.BlockSpec((None, R, P), lambda i: (i, 0, 0)),
        compiler_params=pltpu.CompilerParams(
            dimension_semantics=("parallel",)),
    )(xf, masks, w0, s0, b0, w1, s1, b1)

    return out.reshape(N, C, H, W)     # free reshape back: no crop, no HBM round trip


# ---------------------------- pure-JAX reference ----------------------------
def _bc(v):
    return v[None, :, None, None]


def _ref_block(x_nchw, w_oihw, conv_b, gamma, beta, mean, var):
    y = jax.lax.conv_general_dilated(
        x_nchw, w_oihw, (1, 1), "SAME",
        dimension_numbers=("NCHW", "OIHW", "NCHW"),
        precision=jax.lax.Precision.HIGHEST)
    y = y + _bc(conv_b)
    y = (y - _bc(mean)) / jnp.sqrt(_bc(var) + BN_EPS) * _bc(gamma) + _bc(beta)
    y = jnp.where(y > 0, y, LEAKY_SLOPE * y)
    return y + x_nchw


def residual_reference(x_nchw, p):
    o0 = _ref_block(x_nchw, p["w0"], p["cb0"], p["g0"], p["be0"], p["m0"], p["v0"])
    o1 = _ref_block(o0, p["w1"], p["cb1"], p["g1"], p["be1"], p["m1"], p["v1"])
    return o1


if __name__ == "__main__":
    N, C, H, W = 2, 4, 16, 16
    key = jax.random.PRNGKey(0)
    k_x, k_p = jax.random.split(key)
    x = jax.random.normal(k_x, (N, C, H, W), jnp.float32)

    ks = jax.random.split(k_p, 8)
    bound = 1.0 / (C * 9) ** 0.5  # kaiming-uniform-like bound, deterministic init
    params = dict(
        # conv weights stored OIHW like torch: (C_out, C_in, kh, kw)
        w0=jax.random.uniform(ks[0], (C, C, 3, 3), jnp.float32, -bound, bound),
        cb0=jax.random.uniform(ks[1], (C,), jnp.float32, -bound, bound),
        g0=jax.random.uniform(ks[2], (C,), jnp.float32, 0.5, 1.5),
        be0=jax.random.uniform(ks[3], (C,), jnp.float32, -0.5, 0.5),
        m0=jnp.zeros((C,), jnp.float32), v0=jnp.ones((C,), jnp.float32),
        w1=jax.random.uniform(ks[4], (C, C, 3, 3), jnp.float32, -bound, bound),
        cb1=jax.random.uniform(ks[5], (C,), jnp.float32, -bound, bound),
        g1=jax.random.uniform(ks[6], (C,), jnp.float32, 0.5, 1.5),
        be1=jax.random.uniform(ks[7], (C,), jnp.float32, -0.5, 0.5),
        m1=jnp.zeros((C,), jnp.float32), v1=jnp.ones((C,), jnp.float32),
    )

    out = jax.block_until_ready(jax.jit(residual_forward)(x, params))
    ref = jax.block_until_ready(residual_reference(x, params))

    assert out.shape == (N, C, H, W) and out.dtype == jnp.float32
    assert jnp.allclose(out, ref, rtol=1e-2, atol=1e-2), "mismatch vs pure-JAX reference"

    print("KERNEL_OK")
</pallas_src>

<mosaic_0001>
module attributes {stable_mosaic.version = 11 : i64} {
  func.func @kernel(%arg0: i32, %arg1: memref<1x8x256xf32, #tpu.memory_space<vmem>>, %arg2: memref<9x256xf32, #tpu.memory_space<vmem>>, %arg3: memref<8x72xf32, #tpu.memory_space<vmem>>, %arg4: memref<8x1xf32, #tpu.memory_space<vmem>>, %arg5: memref<8x1xf32, #tpu.memory_space<vmem>>, %arg6: memref<8x72xf32, #tpu.memory_space<vmem>>, %arg7: memref<8x1xf32, #tpu.memory_space<vmem>>, %arg8: memref<8x1xf32, #tpu.memory_space<vmem>>, %arg9: memref<1x8x256xf32, #tpu.memory_space<vmem>>) attributes {dimension_semantics = [#tpu.dimension_semantics<parallel>], iteration_bounds = array<i64: 1>, scalar_prefetch = 0 : i64, scratch_operands = 0 : i64, tpu.core_type = #tpu.core_type<tc>, window_params = [{transform_indices = @transform_0, window_bounds = array<i64: 1, 8, 256>}, {pipeline_mode = #tpu.pipeline_mode<synchronous>, transform_indices = @transform_1, window_bounds = array<i64: 9, 256>}, {pipeline_mode = #tpu.pipeline_mode<synchronous>, transform_indices = @transform_2, window_bounds = array<i64: 8, 72>}, {pipeline_mode = #tpu.pipeline_mode<synchronous>, transform_indices = @transform_3, window_bounds = array<i64: 8, 1>}, {pipeline_mode = #tpu.pipeline_mode<synchronous>, transform_indices = @transform_4, window_bounds = array<i64: 8, 1>}, {pipeline_mode = #tpu.pipeline_mode<synchronous>, transform_indices = @transform_5, window_bounds = array<i64: 8, 72>}, {pipeline_mode = #tpu.pipeline_mode<synchronous>, transform_indices = @transform_6, window_bounds = array<i64: 8, 1>}, {pipeline_mode = #tpu.pipeline_mode<synchronous>, transform_indices = @transform_7, window_bounds = array<i64: 8, 1>}, {transform_indices = @transform_8, window_bounds = array<i64: 1, 8, 256>}]} {
    %c0 = arith.constant 0 : index
    %c0_0 = arith.constant 0 : index
    %0 = vector.load %arg2[%c0, %c0_0] : memref<9x256xf32, #tpu.memory_space<vmem>>, vector<9x256xf32>
    %c0_1 = arith.constant 0 : index
    %c0_2 = arith.constant 0 : index
    %c0_3 = arith.constant 0 : index
    %1 = vector.load %arg1[%c0_1, %c0_2, %c0_3] : memref<1x8x256xf32, #tpu.memory_space<vmem>>, vector<1x8x256xf32>
    %2 = vector.shape_cast %1 : vector<1x8x256xf32> to vector<8x256xf32>
    %3 = vector.extract_strided_slice %2 {offsets = [0, 239], sizes = [8, 17], strides = [1, 1]} : vector<8x256xf32> to vector<8x17xf32>
    %4 = vector.extract_strided_slice %2 {offsets = [0, 0], sizes = [8, 239], strides = [1, 1]} : vector<8x256xf32> to vector<8x239xf32>
    %5 = tpu.concatenate %3, %4 in 1 : vector<8x17xf32>, vector<8x239xf32> -> vector<8x256xf32>
    %6 = vector.extract_strided_slice %0 {offsets = [0, 0], sizes = [1, 256], strides = [1, 1]} : vector<9x256xf32> to vector<1x256xf32>
    %7 = vector.broadcast %6 : vector<1x256xf32> to vector<8x256xf32>
    %8 = arith.mulf %5, %7 : vector<8x256xf32>
    %9 = vector.extract_strided_slice %2 {offsets = [0, 240], sizes = [8, 16], strides = [1, 1]} : vector<8x256xf32> to vector<8x16xf32>
    %10 = vector.extract_strided_slice %2 {offsets = [0, 0], sizes = [8, 240], strides = [1, 1]} : vector<8x256xf32> to vector<8x240xf32>
    %11 = tpu.concatenate %9, %10 in 1 : vector<8x16xf32>, vector<8x240xf32> -> vector<8x256xf32>
    %12 = vector.extract_strided_slice %0 {offsets = [1, 0], sizes = [1, 256], strides = [1, 1]} : vector<9x256xf32> to vector<1x256xf32>
    %13 = vector.broadcast %12 : vector<1x256xf32> to vector<8x256xf32>
    %14 = arith.mulf %11, %13 : vector<8x256xf32>
    %15 = vector.extract_strided_slice %2 {offsets = [0, 241], sizes = [8, 15], strides = [1, 1]} : vector<8x256xf32> to vector<8x15xf32>
    %16 = vector.extract_strided_slice %2 {offsets = [0, 0], sizes = [8, 241], strides = [1, 1]} : vector<8x256xf32> to vector<8x241xf32>
    %17 = tpu.concatenate %15, %16 in 1 : vector<8x15xf32>, vector<8x241xf32> -> vector<8x256xf32>
    %18 = vector.extract_strided_slice %0 {offsets = [2, 0], sizes = [1, 256], strides = [1, 1]} : vector<9x256xf32> to vector<1x256xf32>
    %19 = vector.broadcast %18 : vector<1x256xf32> to vector<8x256xf32>
    %20 = arith.mulf %17, %19 : vector<8x256xf32>
    %21 = vector.extract_strided_slice %2 {offsets = [0, 255], sizes = [8, 1], strides = [1, 1]} : vector<8x256xf32> to vector<8x1xf32>
    %22 = vector.extract_strided_slice %2 {offsets = [0, 0], sizes = [8, 255], strides = [1, 1]} : vector<8x256xf32> to vector<8x255xf32>
    %23 = tpu.concatenate %21, %22 in 1 : vector<8x1xf32>, vector<8x255xf32> -> vector<8x256xf32>
    %24 = vector.extract_strided_slice %0 {offsets = [3, 0], sizes = [1, 256], strides = [1, 1]} : vector<9x256xf32> to vector<1x256xf32>
    %25 = vector.broadcast %24 : vector<1x256xf32> to vector<8x256xf32>
    %26 = arith.mulf %23, %25 : vector<8x256xf32>
    %27 = vector.extract_strided_slice %0 {offsets = [4, 0], sizes = [1, 256], strides = [1, 1]} : vector<9x256xf32> to vector<1x256xf32>
    %28 = vector.broadcast %27 : vector<1x256xf32> to vector<8x256xf32>
    %29 = arith.mulf %2, %28 : vector<8x256xf32>
    %30 = vector.extract_strided_slice %2 {offsets = [0, 1], sizes = [8, 255], strides = [1, 1]} : vector<8x256xf32> to vector<8x255xf32>
    %31 = vector.extract_strided_slice %2 {offsets = [0, 0], sizes = [8, 1], strides = [1, 1]} : vector<8x256xf32> to vector<8x1xf32>
    %32 = tpu.concatenate %30, %31 in 1 : vector<8x255xf32>, vector<8x1xf32> -> vector<8x256xf32>
    %33 = vector.extract_strided_slice %0 {offsets = [5, 0], sizes = [1, 256], strides = [1, 1]} : vector<9x256xf32> to vector<1x256xf32>
    %34 = vector.broadcast %33 : vector<1x256xf32> to vector<8x256xf32>
    %35 = arith.mulf %32, %34 : vector<8x256xf32>
    %36 = vector.extract_strided_slice %2 {offsets = [0, 15], sizes = [8, 241], strides = [1, 1]} : vector<8x256xf32> to vector<8x241xf32>
    %37 = vector.extract_strided_slice %2 {offsets = [0, 0], sizes = [8, 15], strides = [1, 1]} : vector<8x256xf32> to vector<8x15xf32>
    %38 = tpu.concatenate %36, %37 in 1 : vector<8x241xf32>, vector<8x15xf32> -> vector<8x256xf32>
    %39 = vector.extract_strided_slice %0 {offsets = [6, 0], sizes = [1, 256], strides = [1, 1]} : vector<9x256xf32> to vector<1x256xf32>
    %40 = vector.broadcast %39 : vector<1x256xf32> to vector<8x256xf32>
    %41 = arith.mulf %38, %40 : vector<8x256xf32>
    %42 = vector.extract_strided_slice %2 {offsets = [0, 16], sizes = [8, 240], strides = [1, 1]} : vector<8x256xf32> to vector<8x240xf32>
    %43 = vector.extract_strided_slice %2 {offsets = [0, 0], sizes = [8, 16], strides = [1, 1]} : vector<8x256xf32> to vector<8x16xf32>
    %44 = tpu.concatenate %42, %43 in 1 : vector<8x240xf32>, vector<8x16xf32> -> vector<8x256xf32>
    %45 = vector.extract_strided_slice %0 {offsets = [7, 0], sizes = [1, 256], strides = [1, 1]} : vector<9x256xf32> to vector<1x256xf32>
    %46 = vector.broadcast %45 : vector<1x256xf32> to vector<8x256xf32>
    %47 = arith.mulf %44, %46 : vector<8x256xf32>
    %48 = vector.extract_strided_slice %2 {offsets = [0, 17], sizes = [8, 239], strides = [1, 1]} : vector<8x256xf32> to vector<8x239xf32>
    %49 = vector.extract_strided_slice %2 {offsets = [0, 0], sizes = [8, 17], strides = [1, 1]} : vector<8x256xf32> to vector<8x17xf32>
    %50 = tpu.concatenate %48, %49 in 1 : vector<8x239xf32>, vector<8x17xf32> -> vector<8x256xf32>
    %51 = vector.extract_strided_slice %0 {offsets = [8, 0], sizes = [1, 256], strides = [1, 1]} : vector<9x256xf32> to vector<1x256xf32>
    %52 = vector.broadcast %51 : vector<1x256xf32> to vector<8x256xf32>
    %53 = arith.mulf %50, %52 : vector<8x256xf32>
    %54 = tpu.concatenate %8, %14, %20, %26, %29, %35, %41, %47, %53 in 0 : vector<8x256xf32>, vector<8x256xf32>, vector<8x256xf32>, vector<8x256xf32>, vector<8x256xf32>, vector<8x256xf32>, vector<8x256xf32>, vector<8x256xf32>, vector<8x256xf32> -> vector<72x256xf32>
    %c0_4 = arith.constant 0 : index
    %c0_5 = arith.constant 0 : index
    %55 = vector.load %arg3[%c0_4, %c0_5] : memref<8x72xf32, #tpu.memory_space<vmem>>, vector<8x72xf32>
    %cst = arith.constant dense<0.000000e+00> : vector<8x256xf32>
    %56 = tpu.matmul %55, %54, %cst {dimension_numbers = #tpu.dot_dimension_numbers<[1], [0], [0], [1], [0, 0, 1, 1], [], []>} : vector<8x72xf32>, vector<72x256xf32>, vector<8x256xf32> -> vector<8x256xf32>
    %c0_6 = arith.constant 0 : index
    %c0_7 = arith.constant 0 : index
    %57 = vector.load %arg4[%c0_6, %c0_7] : memref<8x1xf32, #tpu.memory_space<vmem>>, vector<8x1xf32>
    %58 = vector.broadcast %57 : vector<8x1xf32> to vector<8x256xf32>
    %59 = arith.mulf %56, %58 : vector<8x256xf32>
    %c0_8 = arith.constant 0 : index
    %c0_9 = arith.constant 0 : index
    %60 = vector.load %arg5[%c0_8, %c0_9] : memref<8x1xf32, #tpu.memory_space<vmem>>, vector<8x1xf32>
    %61 = vector.broadcast %60 : vector<8x1xf32> to vector<8x256xf32>
    %62 = arith.addf %59, %61 : vector<8x256xf32>
    %cst_10 = arith.constant 0.000000e+00 : f32
    %63 = vector.broadcast %cst_10 : f32 to vector<8x256xf32>
    %64 = arith.cmpf ogt, %62, %63 : vector<8x256xf32>
    %cst_11 = arith.constant 0.00999999977 : f32
    %65 = vector.broadcast %cst_11 : f32 to vector<8x256xf32>
    %66 = arith.mulf %65, %62 : vector<8x256xf32>
    %67 = arith.select %64, %62, %66 : vector<8x256xi1>, vector<8x256xf32>
    %68 = arith.addf %67, %2 : vector<8x256xf32>
    %69 = vector.extract_strided_slice %68 {offsets = [0, 239], sizes = [8, 17], strides = [1, 1]} : vector<8x256xf32> to vector<8x17xf32>
    %70 = vector.extract_strided_slice %68 {offsets = [0, 0], sizes = [8, 239], strides = [1, 1]} : vector<8x256xf32> to vector<8x239xf32>
    %71 = tpu.concatenate %69, %70 in 1 : vector<8x17xf32>, vector<8x239xf32> -> vector<8x256xf32>
    %72 = vector.extract_strided_slice %0 {offsets = [0, 0], sizes = [1, 256], strides = [1, 1]} : vector<9x256xf32> to vector<1x256xf32>
    %73 = vector.broadcast %72 : vector<1x256xf32> to vector<8x256xf32>
    %74 = arith.mulf %71, %73 : vector<8x256xf32>
    %75 = vector.extract_strided_slice %68 {offsets = [0, 240], sizes = [8, 16], strides = [1, 1]} : vector<8x256xf32> to vector<8x16xf32>
    %76 = vector.extract_strided_slice %68 {offsets = [0, 0], sizes = [8, 240], strides = [1, 1]} : vector<8x256xf32> to vector<8x240xf32>
    %77 = tpu.concatenate %75, %76 in 1 : vector<8x16xf32>, vector<8x240xf32> -> vector<8x256xf32>
    %78 = vector.extract_strided_slice %0 {offsets = [1, 0], sizes = [1, 256], strides = [1, 1]} : vector<9x256xf32> to vector<1x256xf32>
    %79 = vector.broadcast %78 : vector<1x256xf32> to vector<8x256xf32>
    %80 = arith.mulf %77, %79 : vector<8x256xf32>
    %81 = vector.extract_strided_slice %68 {offsets = [0, 241], sizes = [8, 15], strides = [1, 1]} : vector<8x256xf32> to vector<8x15xf32>
    %82 = vector.extract_strided_slice %68 {offsets = [0, 0], sizes = [8, 241], strides = [1, 1]} : vector<8x256xf32> to vector<8x241xf32>
    %83 = tpu.concatenate %81, %82 in 1 : vector<8x15xf32>, vector<8x241xf32> -> vector<8x256xf32>
    %84 = vector.extract_strided_slice %0 {offsets = [2, 0], sizes = [1, 256], strides = [1, 1]} : vector<9x256xf32> to vector<1x256xf32>
    %85 = vector.broadcast %84 : vector<1x256xf32> to vector<8x256xf32>
    %86 = arith.mulf %83, %85 : vector<8x256xf32>
    %87 = vector.extract_strided_slice %68 {offsets = [0, 255], sizes = [8, 1], strides = [1, 1]} : vector<8x256xf32> to vector<8x1xf32>
    %88 = vector.extract_strided_slice %68 {offsets = [0, 0], sizes = [8, 255], strides = [1, 1]} : vector<8x256xf32> to vector<8x255xf32>
    %89 = tpu.concatenate %87, %88 in 1 : vector<8x1xf32>, vector<8x255xf32> -> vector<8x256xf32>
    %90 = vector.extract_strided_slice %0 {offsets = [3, 0], sizes = [1, 256], strides = [1, 1]} : vector<9x256xf32> to vector<1x256xf32>
    %91 = vector.broadcast %90 : vector<1x256xf32> to vector<8x256xf32>
    %92 = arith.mulf %89, %91 : vector<8x256xf32>
    %93 = vector.extract_strided_slice %0 {offsets = [4, 0], sizes = [1, 256], strides = [1, 1]} : vector<9x256xf32> to vector<1x256xf32>
    %94 = vector.broadcast %93 : vector<1x256xf32> to vector<8x256xf32>
    %95 = arith.mulf %68, %94 : vector<8x256xf32>
    %96 = vector.extract_strided_slice %68 {offsets = [0, 1], sizes = [8, 255], strides = [1, 1]} : vector<8x256xf32> to vector<8x255xf32>
    %97 = vector.extract_strided_slice %68 {offsets = [0, 0], sizes = [8, 1], strides = [1, 1]} : vector<8x256xf32> to vector<8x1xf32>
    %98 = tpu.concatenate %96, %97 in 1 : vector<8x255xf32>, vector<8x1xf32> -> vector<8x256xf32>
    %99 = vector.extract_strided_slice %0 {offsets = [5, 0], sizes = [1, 256], strides = [1, 1]} : vector<9x256xf32> to vector<1x256xf32>
    %100 = vector.broadcast %99 : vector<1x256xf32> to vector<8x256xf32>
    %101 = arith.mulf %98, %100 : vector<8x256xf32>
    %102 = vector.extract_strided_slice %68 {offsets = [0, 15], sizes = [8, 241], strides = [1, 1]} : vector<8x256xf32> to vector<8x241xf32>
    %103 = vector.extract_strided_slice %68 {offsets = [0, 0], sizes = [8, 15], strides = [1, 1]} : vector<8x256xf32> to vector<8x15xf32>
    %104 = tpu.concatenate %102, %103 in 1 : vector<8x241xf32>, vector<8x15xf32> -> vector<8x256xf32>
    %105 = vector.extract_strided_slice %0 {offsets = [6, 0], sizes = [1, 256], strides = [1, 1]} : vector<9x256xf32> to vector<1x256xf32>
    %106 = vector.broadcast %105 : vector<1x256xf32> to vector<8x256xf32>
    %107 = arith.mulf %104, %106 : vector<8x256xf32>
    %108 = vector.extract_strided_slice %68 {offsets = [0, 16], sizes = [8, 240], strides = [1, 1]} : vector<8x256xf32> to vector<8x240xf32>
    %109 = vector.extract_strided_slice %68 {offsets = [0, 0], sizes = [8, 16], strides = [1, 1]} : vector<8x256xf32> to vector<8x16xf32>
    %110 = tpu.concatenate %108, %109 in 1 : vector<8x240xf32>, vector<8x16xf32> -> vector<8x256xf32>
    %111 = vector.extract_strided_slice %0 {offsets = [7, 0], sizes = [1, 256], strides = [1, 1]} : vector<9x256xf32> to vector<1x256xf32>
    %112 = vector.broadcast %111 : vector<1x256xf32> to vector<8x256xf32>
    %113 = arith.mulf %110, %112 : vector<8x256xf32>
    %114 = vector.extract_strided_slice %68 {offsets = [0, 17], sizes = [8, 239], strides = [1, 1]} : vector<8x256xf32> to vector<8x239xf32>
    %115 = vector.extract_strided_slice %68 {offsets = [0, 0], sizes = [8, 17], strides = [1, 1]} : vector<8x256xf32> to vector<8x17xf32>
    %116 = tpu.concatenate %114, %115 in 1 : vector<8x239xf32>, vector<8x17xf32> -> vector<8x256xf32>
    %117 = vector.extract_strided_slice %0 {offsets = [8, 0], sizes = [1, 256], strides = [1, 1]} : vector<9x256xf32> to vector<1x256xf32>
    %118 = vector.broadcast %117 : vector<1x256xf32> to vector<8x256xf32>
    %119 = arith.mulf %116, %118 : vector<8x256xf32>
    %120 = tpu.concatenate %74, %80, %86, %92, %95, %101, %107, %113, %119 in 0 : vector<8x256xf32>, vector<8x256xf32>, vector<8x256xf32>, vector<8x256xf32>, vector<8x256xf32>, vector<8x256xf32>, vector<8x256xf32>, vector<8x256xf32>, vector<8x256xf32> -> vector<72x256xf32>
    %c0_12 = arith.constant 0 : index
    %c0_13 = arith.constant 0 : index
    %121 = vector.load %arg6[%c0_12, %c0_13] : memref<8x72xf32, #tpu.memory_space<vmem>>, vector<8x72xf32>
    %cst_14 = arith.constant dense<0.000000e+00> : vector<8x256xf32>
    %122 = tpu.matmul %121, %120, %cst_14 {dimension_numbers = #tpu.dot_dimension_numbers<[1], [0], [0], [1], [0, 0, 1, 1], [], []>} : vector<8x72xf32>, vector<72x256xf32>, vector<8x256xf32> -> vector<8x256xf32>
    %c0_15 = arith.constant 0 : index
    %c0_16 = arith.constant 0 : index
    %123 = vector.load %arg7[%c0_15, %c0_16] : memref<8x1xf32, #tpu.memory_space<vmem>>, vector<8x1xf32>
    %124 = vector.broadcast %123 : vector<8x1xf32> to vector<8x256xf32>
    %125 = arith.mulf %122, %124 : vector<8x256xf32>
    %c0_17 = arith.constant 0 : index
    %c0_18 = arith.constant 0 : index
    %126 = vector.load %arg8[%c0_17, %c0_18] : memref<8x1xf32, #tpu.memory_space<vmem>>, vector<8x1xf32>
    %127 = vector.broadcast %126 : vector<8x1xf32> to vector<8x256xf32>
    %128 = arith.addf %125, %127 : vector<8x256xf32>
    %cst_19 = arith.constant 0.000000e+00 : f32
    %129 = vector.broadcast %cst_19 : f32 to vector<8x256xf32>
    %130 = arith.cmpf ogt, %128, %129 : vector<8x256xf32>
    %cst_20 = arith.constant 0.00999999977 : f32
    %131 = vector.broadcast %cst_20 : f32 to vector<8x256xf32>
    %132 = arith.mulf %131, %128 : vector<8x256xf32>
    %133 = arith.select %130, %128, %132 : vector<8x256xi1>, vector<8x256xf32>
    %134 = arith.addf %133, %68 : vector<8x256xf32>
    %c0_21 = arith.constant 0 : index
    %c0_22 = arith.constant 0 : index
    %c0_23 = arith.constant 0 : index
    %135 = vector.load %arg9[%c0_21, %c0_22, %c0_23] : memref<1x8x256xf32, #tpu.memory_space<vmem>>, vector<1x8x256xf32>
    %136 = vector.shape_cast %135 : vector<1x8x256xf32> to vector<8x256xf32>
    %137 = vector.shape_cast %134 : vector<8x256xf32> to vector<1x8x256xf32>
    tpu.vector_store %arg9[%c0_21, %c0_22, %c0_23], %137 {strides = array<i32>} : memref<1x8x256xf32, #tpu.memory_space<vmem>>, vector<1x8x256xf32>,
    return
  }
  func.func @transform_0(%arg0: i32) -> (i32, i32, i32) {
    %c0_i32 = arith.constant 0 : i32
    %c0_i32_0 = arith.constant 0 : i32
    %c0_i32_1 = arith.constant 0 : i32
    return %arg0, %c0_i32, %c0_i32_0 : i32, i32, i32
  }
  func.func @transform_1(%arg0: i32) -> (i32, i32) {
    %c0_i32 = arith.constant 0 : i32
    %c0_i32_0 = arith.constant 0 : i32
    %c0_i32_1 = arith.constant 0 : i32
    return %c0_i32, %c0_i32_0 : i32, i32
  }
  func.func @transform_2(%arg0: i32) -> (i32, i32) {
    %c0_i32 = arith.constant 0 : i32
    %c0_i32_0 = arith.constant 0 : i32
    %c0_i32_1 = arith.constant 0 : i32
    return %c0_i32, %c0_i32_0 : i32, i32
  }
  func.func @transform_3(%arg0: i32) -> (i32, i32) {
    %c0_i32 = arith.constant 0 : i32
    %c0_i32_0 = arith.constant 0 : i32
    %c0_i32_1 = arith.constant 0 : i32
    return %c0_i32, %c0_i32_0 : i32, i32
  }
  func.func @transform_4(%arg0: i32) -> (i32, i32) {
    %c0_i32 = arith.constant 0 : i32
    %c0_i32_0 = arith.constant 0 : i32
    %c0_i32_1 = arith.constant 0 : i32
    return %c0_i32, %c0_i32_0 : i32, i32
  }
  func.func @transform_5(%arg0: i32) -> (i32, i32) {
    %c0_i32 = arith.constant 0 : i32
    %c0_i32_0 = arith.constant 0 : i32
    %c0_i32_1 = arith.constant 0 : i32
    return %c0_i32, %c0_i32_0 : i32, i32
  }
  func.func @transform_6(%arg0: i32) -> (i32, i32) {
    %c0_i32 = arith.constant 0 : i32
    %c0_i32_0 = arith.constant 0 : i32
    %c0_i32_1 = arith.constant 0 : i32
    return %c0_i32, %c0_i32_0 : i32, i32
  }
  func.func @transform_7(%arg0: i32) -> (i32, i32) {
    %c0_i32 = arith.constant 0 : i32
    %c0_i32_0 = arith.constant 0 : i32
    %c0_i32_1 = arith.constant 0 : i32
    return %c0_i32, %c0_i32_0 : i32, i32
  }
  func.func @transform_8(%arg0: i32) -> (i32, i32, i32) {
    %c0_i32 = arith.constant 0 : i32
    %c0_i32_0 = arith.constant 0 : i32
    %c0_i32_1 = arith.constant 0 : i32
    return %arg0, %c0_i32, %c0_i32_0 : i32, i32, i32
  }
}

</mosaic_0001>

<llo_original>
// kernel: tile.23
$region0: #{tile.23}
  #allocation0 [shape = 's32[1]{0}', space=sflag, size = 0x4, scoped, tag = 'scoped memory for tile.23']
  %s0 = inlined_call_operand.vmem [shape: f32[4], index: 0, kind: input, shape index: {}]
  %s1 = inlined_call_operand.vmem [shape: f32[2,4], index: 1, kind: output, shape index: {}]
  // Predicated region
  $region2: #{tile.23} parent=0 // pred_check
    _
  $region3: #{tile.23} parent=0 // pred_check_branch
    %3 = sbr.rel (0) target = $region5
  $region4: #{tile.23} parent=0 // pred_region
    _
  $region5: #{tile.23} parent=0 // pred_fallthru
    _
  %v4 = vld [vmem:[%s0] ss:$0 sm:$0xff]
  %5 = vst [vmem:[%s1] sm:$0x3] %v4

// kernel: tile.0
$region0: #{tile.0}
  %s0 = inlined_call_operand.vmem [shape: f32[2,4], index: 0, kind: input, shape index: {}]
  %s1 = inlined_call_operand.vmem [shape: f32[8,1], index: 1, kind: output, shape index: {}]
  $region1: #{tile.0} parent=0
    #allocation0 [shape = 'u8[4096]{0}', space=vmem, size = 0x1000, scoped, tag = 'scoped mem for input reshape']
    %s3 = sshllo.u32 0, 2
    %v4 = vld [vmem:[%s0] sm:%s3]
    %5 = vst [vmem:[#allocation0] sm:%s3] %v4
    %v6 = vld [vmem:[#allocation0] sm:$0x3]
    %vm7 = vcmask 7168
    %8 = vst.msk [vmem:[%s1] ss:$4 sm:$0x3] %vm7, %v6
    %v9 = vld [vmem:[#allocation0] sm:$0x3]
    %10 = vrot.lane.b32.xlu0 %v9, 127
    %v11 = vpop.permute.xlu0 %10
    %vm12 = vcmask 7168
    %s13 = scalar_lea.vmem %s1, 1
    %14 = vst.msk [vmem:[%s13] ss:$4 sm:$0x3] %vm12, %v11
    %v15 = vld [vmem:[#allocation0] sm:$0x3]
    %16 = vrot.lane.b32.xlu0 %v15, 126
    %v17 = vpop.permute.xlu0 %16
    %vm18 = vcmask 7168
    %s19 = scalar_lea.vmem %s1, 2
    %20 = vst.msk [vmem:[%s19] ss:$4 sm:$0x3] %vm18, %v17
    %v21 = vld [vmem:[#allocation0] sm:$0x3]
    %22 = vrot.lane.b32.xlu0 %v21, 125
    %v23 = vpop.permute.xlu0 %22
    %vm24 = vcmask 7168
    %s25 = scalar_lea.vmem %s1, 3
    %26 = vst.msk [vmem:[%s25] ss:$4 sm:$0x3] %vm24, %v23

// kernel: residual_forward.1
$region0: #{residual_forward.1}
  #allocation0 [shape = 'u32[]', space=smem, size = 0x4, offset = 0x4, fixed_abs, tag = 'smem constant byte address 0x4 - core index']
  #allocation1 [shape = 'u32[144,128]{1,0:T(1,128)}', space=vmem, size = 0x12000, scoped, tag = 'internal scratch']
  %s0 = inlined_call_operand.vmem [shape: f32[1,8,256], index: 0, kind: input, shape index: {}]
  %s1 = inlined_call_operand.vmem [shape: f32[9,256], index: 1, kind: input, shape index: {}]
  %s2 = inlined_call_operand.vmem [shape: f32[8,72], index: 2, kind: input, shape index: {}]
  %s3 = inlined_call_operand.vmem [shape: f32[8,1], index: 3, kind: input, shape index: {}]
  %s4 = inlined_call_operand.vmem [shape: f32[8,1], index: 4, kind: input, shape index: {}]
  %s5 = inlined_call_operand.vmem [shape: f32[8,72], index: 5, kind: input, shape index: {}]
  %s6 = inlined_call_operand.vmem [shape: f32[8,1], index: 6, kind: input, shape index: {}]
  %s7 = inlined_call_operand.vmem [shape: f32[8,1], index: 7, kind: input, shape index: {}]
  %s8 = inlined_call_operand.vmem [shape: f32[1,8,256], index: 8, kind: output, shape index: {}]
  %s9 = sld [smem:[#allocation0]]
  $region42: #{residual_forward.1} parent=0
    _
  %s11 = ssub.s32 1, %s9
  %s12 = scalar_select 0, %s11, %s9
  // Predicated region
  $region2: #{residual_forward.1} parent=0 // pred_check
    _
  $region3: #{residual_forward.1} parent=0 // pred_check_branch
    %14 = sbr.rel (0) target = $region5
  $region4: #{residual_forward.1} parent=0 // pred_region
    _
  $region5: #{residual_forward.1} parent=0 // pred_fallthru
    _
  // Predicated region
  $region6: #{residual_forward.1} parent=0 // pred_check
    _
  $region7: #{residual_forward.1} parent=0 // pred_check_branch
    %16 = sbr.rel (0) target = $region9
  $region8: #{residual_forward.1} parent=0 // pred_region
    _
  $region9: #{residual_forward.1} parent=0 // pred_fallthru
    _
  // Predicated region
  $region10: #{residual_forward.1} parent=0 // pred_check
    _
  $region11: #{residual_forward.1} parent=0 // pred_check_branch
    %18 = sbr.rel (0) target = $region13
  $region12: #{residual_forward.1} parent=0 // pred_region
    _
  $region13: #{residual_forward.1} parent=0 // pred_fallthru
    _
  // Predicated region
  $region14: #{residual_forward.1} parent=0 // pred_check
    _
  $region15: #{residual_forward.1} parent=0 // pred_check_branch
    %20 = sbr.rel (0) target = $region17
  $region16: #{residual_forward.1} parent=0 // pred_region
    _
  $region17: #{residual_forward.1} parent=0 // pred_fallthru
    _
  // Predicated region
  $region18: #{residual_forward.1} parent=0 // pred_check
    _
  $region19: #{residual_forward.1} parent=0 // pred_check_branch
    %22 = sbr.rel (0) target = $region21
  $region20: #{residual_forward.1} parent=0 // pred_region
    _
  $region21: #{residual_forward.1} parent=0 // pred_fallthru
    _
  // Predicated region
  $region22: #{residual_forward.1} parent=0 // pred_check
    _
  $region23: #{residual_forward.1} parent=0 // pred_check_branch
    %24 = sbr.rel (0) target = $region25
  $region24: #{residual_forward.1} parent=0 // pred_region
    _
  $region25: #{residual_forward.1} parent=0 // pred_fallthru
    _
  // Predicated region
  $region26: #{residual_forward.1} parent=0 // pred_check
    _
  $region27: #{residual_forward.1} parent=0 // pred_check_branch
    %26 = sbr.rel (0) target = $region29
  $region28: #{residual_forward.1} parent=0 // pred_region
    _
  $region29: #{residual_forward.1} parent=0 // pred_fallthru
    _
  // Predicated region
  $region30: #{residual_forward.1} parent=0 // pred_check
    _
  $region31: #{residual_forward.1} parent=0 // pred_check_branch
    %28 = sbr.rel (0) target = $region33
  $region32: #{residual_forward.1} parent=0 // pred_region
    _
  $region33: #{residual_forward.1} parent=0 // pred_fallthru
    _
  %v29 = vld [vmem:[%s1] sm:$0xff]
  %v30 = vld [vmem:[%s1 + $0x8] sm:$0xff]
  %v31 = vld [vmem:[%s1 + $0x10] sm:$0x1]
  %v32 = vld [vmem:[%s1 + $0x18] sm:$0x1]
  %v33 = vld [vmem:[%s0] sm:$0xff]
  %v34 = vld [vmem:[%s0 + $0x8] sm:$0xff]
  %36 = vrot.lane.b32.xlu0 %v34, 17
  %v37 = vpop.permute.xlu0 %36
  %40 = vrot.lane.b32.xlu0 %v33, 17
  %v41 = vpop.permute.xlu0 %40
  %vm42 = vcmask 138240
  %v43 = vsel %vm42, %v41, %v37
  %v46 = vsel %vm42, %v37, %v41
  %v47 = vlaneseq
  %v48 = vshrl.u32 %v47, 7
  %v49 = vsub.s32 0, %v48
  %v50 = vrot.slane %v29, %v49
  %v51 = vlaneseq
  %v52 = vshrl.u32 %v51, 7
  %v53 = vsub.s32 0, %v52
  %v54 = vrot.slane %v30, %v53
  %v55 = vmul.f32 %v46, %v50
  %v56 = vmul.f32 %v43, %v54
  %57 = vrot.lane.b32.xlu0 %v34, 16
  %v58 = vpop.permute.xlu0 %57
  %60 = vrot.lane.b32.xlu0 %v33, 16
  %v61 = vpop.permute.xlu0 %60
  %vm62 = vcmask 130048
  %v63 = vsel %vm62, %v61, %v58
  %v66 = vsel %vm62, %v58, %v61
  %v67 = vlaneseq
  %v68 = vshrl.u32 %v67, 7
  %v69 = vsub.s32 1, %v68
  %v70 = vrot.slane %v29, %v69
  %v71 = vlaneseq
  %v72 = vshrl.u32 %v71, 7
  %v73 = vsub.s32 1, %v72
  %v74 = vrot.slane %v30, %v73
  %v75 = vmul.f32 %v66, %v70
  %v76 = vmul.f32 %v63, %v74
  %77 = vrot.lane.b32.xlu0 %v34, 15
  %v78 = vpop.permute.xlu0 %77
  %80 = vrot.lane.b32.xlu0 %v33, 15
  %v81 = vpop.permute.xlu0 %80
  %vm82 = vcmask 121856
  %v83 = vsel %vm82, %v81, %v78
  %v86 = vsel %vm82, %v78, %v81
  %v87 = vlaneseq
  %v88 = vshrl.u32 %v87, 7
  %v89 = vsub.s32 2, %v88
  %v90 = vrot.slane %v29, %v89
  %v91 = vlaneseq
  %v92 = vshrl.u32 %v91, 7
  %v93 = vsub.s32 2, %v92
  %v94 = vrot.slane %v30, %v93
  %v95 = vmul.f32 %v86, %v90
  %v96 = vmul.f32 %v83, %v94
  %97 = vrot.lane.b32.xlu0 %v34, 1
  %v98 = vpop.permute.xlu0 %97
  %100 = vrot.lane.b32.xlu0 %v33, 1
  %v101 = vpop.permute.xlu0 %100
  %vm102 = vcmask 7168
  %v103 = vsel %vm102, %v101, %v98
  %v106 = vsel %vm102, %v98, %v101
  %v107 = vlaneseq
  %v108 = vshrl.u32 %v107, 7
  %v109 = vsub.s32 3, %v108
  %v110 = vrot.slane %v29, %v109
  %v111 = vlaneseq
  %v112 = vshrl.u32 %v111, 7
  %v113 = vsub.s32 3, %v112
  %v114 = vrot.slane %v30, %v113
  %v115 = vmul.f32 %v106, %v110
  %v116 = vmul.f32 %v103, %v114
  %v117 = vlaneseq
  %v118 = vshrl.u32 %v117, 7
  %v119 = vsub.s32 4, %v118
  %v120 = vrot.slane %v29, %v119
  %v121 = vlaneseq
  %v122 = vshrl.u32 %v121, 7
  %v123 = vsub.s32 4, %v122
  %v124 = vrot.slane %v30, %v123
  %v125 = vmul.f32 %v33, %v120
  %v126 = vmul.f32 %v34, %v124
  %127 = vrot.lane.b32.xlu0 %v33, 127
  %v128 = vpop.permute.xlu0 %127
  %129 = vrot.lane.b32.xlu0 %v34, 127
  %v130 = vpop.permute.xlu0 %129
  %vm131 = vcmask 1039360
  %v132 = vsel %vm131, %v128, %v130
  %v136 = vsel %vm131, %v130, %v128
  %v137 = vlaneseq
  %v138 = vshrl.u32 %v137, 7
  %v139 = vsub.s32 5, %v138
  %v140 = vrot.slane %v29, %v139
  %v141 = vlaneseq
  %v142 = vshrl.u32 %v141, 7
  %v143 = vsub.s32 5, %v142
  %v144 = vrot.slane %v30, %v143
  %v145 = vmul.f32 %v132, %v140
  %v146 = vmul.f32 %v136, %v144
  %147 = vrot.lane.b32.xlu0 %v33, 113
  %v148 = vpop.permute.xlu0 %147
  %149 = vrot.lane.b32.xlu0 %v34, 113
  %v150 = vpop.permute.xlu0 %149
  %vm151 = vcmask 924672
  %v152 = vsel %vm151, %v148, %v150
  %v156 = vsel %vm151, %v150, %v148
  %v157 = vlaneseq
  %v158 = vshrl.u32 %v157, 7
  %v159 = vsub.s32 6, %v158
  %v160 = vrot.slane %v29, %v159
  %v161 = vlaneseq
  %v162 = vshrl.u32 %v161, 7
  %v163 = vsub.s32 6, %v162
  %v164 = vrot.slane %v30, %v163
  %v165 = vmul.f32 %v152, %v160
  %v166 = vmul.f32 %v156, %v164
  %167 = vrot.lane.b32.xlu0 %v33, 112
  %v168 = vpop.permute.xlu0 %167
  %169 = vrot.lane.b32.xlu0 %v34, 112
  %v170 = vpop.permute.xlu0 %169
  %vm171 = vcmask 916480
  %v172 = vsel %vm171, %v168, %v170
  %v176 = vsel %vm171, %v170, %v168
  %v177 = vlaneseq
  %v178 = vshrl.u32 %v177, 7
  %v179 = vsub.s32 7, %v178
  %v180 = vrot.slane %v29, %v179
  %v181 = vlaneseq
  %v182 = vshrl.u32 %v181, 7
  %v183 = vsub.s32 7, %v182
  %v184 = vrot.slane %v30, %v183
  %v185 = vmul.f32 %v172, %v180
  %v186 = vmul.f32 %v176, %v184
  %187 = vrot.lane.b32.xlu0 %v33, 111
  %v188 = vpop.permute.xlu0 %187
  %189 = vrot.lane.b32.xlu0 %v34, 111
  %v190 = vpop.permute.xlu0 %189
  %vm191 = vcmask 908288
  %v192 = vsel %vm191, %v188, %v190
  %v196 = vsel %vm191, %v190, %v188
  %v197 = vlaneseq
  %v198 = vshrl.u32 %v197, 7
  %v199 = vsub.s32 0, %v198
  %v200 = vrot.slane %v31, %v199
  %v201 = vlaneseq
  %v202 = vshrl.u32 %v201, 7
  %v203 = vsub.s32 0, %v202
  %v204 = vrot.slane %v32, %v203
  %v205 = vmul.f32 %v192, %v200
  %v206 = vmul.f32 %v196, %v204
  %v207 = vld [vmem:[%s2] sm:$0xff]
  %vm208 = vcmask 588800
  %v210 = vsel %vm208, %v207, 0
  %212 = vmatprep.subr.mxu0 %v56
  %213 = vmatpush1.msra.mxu0 %v55
  %214 = vmatprep.subr.mxu0 %v76
  %215 = vmatpush1.msra.mxu0 %v75
  %216 = vmatprep.subr.mxu0 %v96
  %217 = vmatpush1.msra.mxu0 %v95
  %218 = vmatprep.subr.mxu0 %v116
  %219 = vmatpush1.msra.mxu0 %v115
  %220 = vmatprep.subr.mxu0 %v126
  %221 = vmatpush1.msra.mxu0 %v125
  %222 = vmatprep.subr.mxu0 %v146
  %223 = vmatpush1.msra.mxu0 %v145
  %224 = vmatprep.subr.mxu0 %v166
  %225 = vmatpush1.msra.mxu0 %v165
  %226 = vmatprep.subr.mxu0 %v186
  %227 = vmatpush1.msra.mxu0 %v185
  %228 = vmatprep.subr.mxu0 %v206
  %229 = vmatpush1.msra.mxu0 %v205
  %230 = vmatprep.subr.mxu0 0.0
  %231 = vmatpush1.msra.mxu0 0.0
  %232 = vmatprep.subr.mxu0 0.0
  %233 = vmatpush1.msra.mxu0 0.0
  %234 = vmatprep.subr.mxu0 0.0
  %235 = vmatpush1.msra.mxu0 0.0
  %236 = vmatprep.subr.mxu0 0.0
  %237 = vmatpush1.msra.mxu0 0.0
  %238 = vmatprep.subr.mxu0 0.0
  %239 = vmatpush1.msra.mxu0 0.0
  %240 = vmatprep.subr.mxu0 0.0
  %241 = vmatpush1.msra.mxu0 0.0
  %242 = vmatprep.subr.mxu0 0.0
  %243 = vmatpush1.msra.mxu0 0.0
  %244 = vmatprep.subr.mxu0 0.0
  %245 = vmatpush1.msra.mxu0 0.0
  %246 = vmatprep.subr.mxu0 0.0
  %247 = vmatpush1.msra.mxu0 0.0
  %248 = vmatprep.subr.mxu0 0.0
  %249 = vmatpush1.msra.mxu0 0.0
  %250 = vmatprep.subr.mxu0 0.0
  %251 = vmatpush1.msra.mxu0 0.0
  %252 = vmatprep.subr.mxu0 0.0
  %253 = vmatpush1.msra.mxu0 0.0
  %254 = vmatprep.subr.mxu0 0.0
  %255 = vmatpush1.msra.mxu0 0.0
  %256 = vmatprep.subr.mxu0 0.0
  %257 = vmatpush1.msra.mxu0 0.0
  %258 = vmatprep.subr.mxu0 0.0
  %259 = vmatpush1.msra.mxu0 0.0
  %260 = vmatprep.subr.mxu0 0.0
  %261 = vmatpush1.msra.mxu0 0.0
  %262 = vmatprep.subr.mxu0 0.0
  %263 = vmatpush1.msra.mxu0 0.0
  %264 = vmatprep.subr.mxu0 0.0
  %265 = vmatpush1.msra.mxu0 0.0
  %266 = vmatprep.subr.mxu0 0.0
  %267 = vmatpush1.msra.mxu0 0.0
  %268 = vmatprep.subr.mxu0 0.0
  %269 = vmatpush1.msra.mxu0 0.0
  %270 = vmatprep.subr.mxu0 0.0
  %271 = vmatpush1.msra.mxu0 0.0
  %272 = vmatprep.subr.mxu0 0.0
  %273 = vmatpush1.msra.mxu0 0.0
  %274 = vmatprep.subr.mxu0 0.0
  %275 = vmatpush1.msra.mxu0 0.0
  %276 = vmatprep.mubr.f32.mxu0 0.0
  %277 = vmatmul.mubr.f32.gmra.mrb[0].mxu0 %v210
  %v278 = vpop.f32.mrb[0].mxu0
  %v279 = vadd.f32 0.0, %v278
  %v280 = vpop.f32.mrb[0].mxu0
  %v281 = vadd.f32 0.0, %v280
  %282 = vdwg.mxu0
  %v283 = vld [vmem:[%s3] sm:$0xff]
  %285 = vset.pattern.permute.xlu0 0
  %286 = vperm.xlu0 %285, %v283
  %v287 = vpop.permute.xlu0 %286
  %v289 = vmul.f32 %v279, %v287
  %v290 = vmul.f32 %v281, %v287
  %v291 = vld [vmem:[%s4] sm:$0xff]
  %293 = vset.pattern.permute.xlu0 0
  %294 = vperm.xlu0 %293, %v291
  %v295 = vpop.permute.xlu0 %294
  %v297 = vadd.f32 %v289, %v295
  %v298 = vadd.f32 %v290, %v295
  %vm299 = vcmp.gt.f32.partialorder %v297, 0.0
  %vm300 = vcmp.gt.f32.partialorder %v298, 0.0
  %v301 = vmul.f32 %v297, 0.01
  %v302 = vmul.f32 %v298, 0.01
  %v303 = vsel %vm299, %v297, %v301
  %v304 = vsel %vm300, %v298, %v302
  %v305 = vadd.f32 %v303, %v33
  %v306 = vadd.f32 %v304, %v34
  %308 = vrot.lane.b32.xlu0 %v306, 17
  %v309 = vpop.permute.xlu0 %308
  %312 = vrot.lane.b32.xlu0 %v305, 17
  %v313 = vpop.permute.xlu0 %312
  %v314 = vsel %vm42, %v313, %v309
  %v317 = vsel %vm42, %v309, %v313
  %v318 = vmul.f32 %v317, %v50
  %v319 = vmul.f32 %v314, %v54
  %320 = vrot.lane.b32.xlu0 %v306, 16
  %v321 = vpop.permute.xlu0 %320
  %323 = vrot.lane.b32.xlu0 %v305, 16
  %v324 = vpop.permute.xlu0 %323
  %v325 = vsel %vm62, %v324, %v321
  %v328 = vsel %vm62, %v321, %v324
  %v329 = vmul.f32 %v328, %v70
  %v330 = vmul.f32 %v325, %v74
  %331 = vrot.lane.b32.xlu0 %v306, 15
  %v332 = vpop.permute.xlu0 %331
  %334 = vrot.lane.b32.xlu0 %v305, 15
  %v335 = vpop.permute.xlu0 %334
  %v336 = vsel %vm82, %v335, %v332
  %v339 = vsel %vm82, %v332, %v335
  %v340 = vmul.f32 %v339, %v90
  %v341 = vmul.f32 %v336, %v94
  %342 = vrot.lane.b32.xlu0 %v306, 1
  %v343 = vpop.permute.xlu0 %342
  %345 = vrot.lane.b32.xlu0 %v305, 1
  %v346 = vpop.permute.xlu0 %345
  %v347 = vsel %vm102, %v346, %v343
  %v350 = vsel %vm102, %v343, %v346
  %v351 = vmul.f32 %v350, %v110
  %v352 = vmul.f32 %v347, %v114
  %v353 = vmul.f32 %v305, %v120
  %v354 = vmul.f32 %v306, %v124
  %355 = vrot.lane.b32.xlu0 %v305, 127
  %v356 = vpop.permute.xlu0 %355
  %357 = vrot.lane.b32.xlu0 %v306, 127
  %v358 = vpop.permute.xlu0 %357
  %v359 = vsel %vm131, %v356, %v358
  %v363 = vsel %vm131, %v358, %v356
  %v364 = vmul.f32 %v359, %v140
  %v365 = vmul.f32 %v363, %v144
  %366 = vrot.lane.b32.xlu0 %v305, 113
  %v367 = vpop.permute.xlu0 %366
  %368 = vrot.lane.b32.xlu0 %v306, 113
  %v369 = vpop.permute.xlu0 %368
  %v370 = vsel %vm151, %v367, %v369
  %v374 = vsel %vm151, %v369, %v367
  %v375 = vmul.f32 %v370, %v160
  %v376 = vmul.f32 %v374, %v164
  %377 = vrot.lane.b32.xlu0 %v305, 112
  %v378 = vpop.permute.xlu0 %377
  %379 = vrot.lane.b32.xlu0 %v306, 112
  %v380 = vpop.permute.xlu0 %379
  %v381 = vsel %vm171, %v378, %v380
  %v385 = vsel %vm171, %v380, %v378
  %v386 = vmul.f32 %v381, %v180
  %v387 = vmul.f32 %v385, %v184
  %388 = vrot.lane.b32.xlu0 %v305, 111
  %v389 = vpop.permute.xlu0 %388
  %390 = vrot.lane.b32.xlu0 %v306, 111
  %v391 = vpop.permute.xlu0 %390
  %v392 = vsel %vm191, %v389, %v391
  %v396 = vsel %vm191, %v391, %v389
  %v397 = vmul.f32 %v392, %v200
  %v398 = vmul.f32 %v396, %v204
  %v399 = vld [vmem:[%s5] sm:$0xff]
  %v401 = vsel %vm208, %v399, 0
  %403 = vmatprep.subr.mxu0 %v319
  %404 = vmatpush1.msra.mxu0 %v318
  %405 = vmatprep.subr.mxu0 %v330
  %406 = vmatpush1.msra.mxu0 %v329
  %407 = vmatprep.subr.mxu0 %v341
  %408 = vmatpush1.msra.mxu0 %v340
  %409 = vmatprep.subr.mxu0 %v352
  %410 = vmatpush1.msra.mxu0 %v351
  %411 = vmatprep.subr.mxu0 %v354
  %412 = vmatpush1.msra.mxu0 %v353
  %413 = vmatprep.subr.mxu0 %v365
  %414 = vmatpush1.msra.mxu0 %v364
  %415 = vmatprep.subr.mxu0 %v376
  %416 = vmatpush1.msra.mxu0 %v375
  %417 = vmatprep.subr.mxu0 %v387
  %418 = vmatpush1.msra.mxu0 %v386
  %419 = vmatprep.subr.mxu0 %v398
  %420 = vmatpush1.msra.mxu0 %v397
  %421 = vmatprep.subr.mxu0 0.0
  %422 = vmatpush1.msra.mxu0 0.0
  %423 = vmatprep.subr.mxu0 0.0
  %424 = vmatpush1.msra.mxu0 0.0
  %425 = vmatprep.subr.mxu0 0.0
  %426 = vmatpush1.msra.mxu0 0.0
  %427 = vmatprep.subr.mxu0 0.0
  %428 = vmatpush1.msra.mxu0 0.0
  %429 = vmatprep.subr.mxu0 0.0
  %430 = vmatpush1.msra.mxu0 0.0
  %431 = vmatprep.subr.mxu0 0.0
  %432 = vmatpush1.msra.mxu0 0.0
  %433 = vmatprep.subr.mxu0 0.0
  %434 = vmatpush1.msra.mxu0 0.0
  %435 = vmatprep.subr.mxu0 0.0
  %436 = vmatpush1.msra.mxu0 0.0
  %437 = vmatprep.subr.mxu0 0.0
  %438 = vmatpush1.msra.mxu0 0.0
  %439 = vmatprep.subr.mxu0 0.0
  %440 = vmatpush1.msra.mxu0 0.0
  %441 = vmatprep.subr.mxu0 0.0
  %442 = vmatpush1.msra.mxu0 0.0
  %443 = vmatprep.subr.mxu0 0.0
  %444 = vmatpush1.msra.mxu0 0.0
  %445 = vmatprep.subr.mxu0 0.0
  %446 = vmatpush1.msra.mxu0 0.0
  %447 = vmatprep.subr.mxu0 0.0
  %448 = vmatpush1.msra.mxu0 0.0
  %449 = vmatprep.subr.mxu0 0.0
  %450 = vmatpush1.msra.mxu0 0.0
  %451 = vmatprep.subr.mxu0 0.0
  %452 = vmatpush1.msra.mxu0 0.0
  %453 = vmatprep.subr.mxu0 0.0
  %454 = vmatpush1.msra.mxu0 0.0
  %455 = vmatprep.subr.mxu0 0.0
  %456 = vmatpush1.msra.mxu0 0.0
  %457 = vmatprep.subr.mxu0 0.0
  %458 = vmatpush1.msra.mxu0 0.0
  %459 = vmatprep.subr.mxu0 0.0
  %460 = vmatpush1.msra.mxu0 0.0
  %461 = vmatprep.subr.mxu0 0.0
  %462 = vmatpush1.msra.mxu0 0.0
  %463 = vmatprep.subr.mxu0 0.0
  %464 = vmatpush1.msra.mxu0 0.0
  %465 = vmatprep.subr.mxu0 0.0
  %466 = vmatpush1.msra.mxu0 0.0
  %467 = vmatprep.mubr.f32.mxu0 0.0
  %468 = vmatmul.mubr.f32.gmra.mrb[0].mxu0 %v401
  %v469 = vpop.f32.mrb[0].mxu0
  %v470 = vadd.f32 0.0, %v469
  %v471 = vpop.f32.mrb[0].mxu0
  %v472 = vadd.f32 0.0, %v471
  %473 = vdwg.mxu0
  %v474 = vld [vmem:[%s6] sm:$0xff]
  %476 = vset.pattern.permute.xlu0 0
  %477 = vperm.xlu0 %476, %v474
  %v478 = vpop.permute.xlu0 %477
  %v480 = vmul.f32 %v470, %v478
  %v481 = vmul.f32 %v472, %v478
  %v482 = vld [vmem:[%s7] sm:$0xff]
  %484 = vset.pattern.permute.xlu0 0
  %485 = vperm.xlu0 %484, %v482
  %v486 = vpop.permute.xlu0 %485
  %v488 = vadd.f32 %v480, %v486
  %v489 = vadd.f32 %v481, %v486
  %vm490 = vcmp.gt.f32.partialorder %v488, 0.0
  %vm491 = vcmp.gt.f32.partialorder %v489, 0.0
  %v492 = vmul.f32 %v488, 0.01
  %v493 = vmul.f32 %v489, 0.01
  %v494 = vsel %vm490, %v488, %v492
  %v495 = vsel %vm491, %v489, %v493
  %v496 = vadd.f32 %v494, %v305
  %v497 = vadd.f32 %v495, %v306
  %498 = vst [vmem:[%s8] sm:$0xff] %v496
  %499 = vst [vmem:[%s8 + $0x8] sm:$0xff] %v497
  // Predicated region
  $region34: #{residual_forward.1} parent=0 // pred_check
    _
  $region35: #{residual_forward.1} parent=0 // pred_check_branch
    %501 = sbr.rel (0) target = $region37
  $region36: #{residual_forward.1} parent=0 // pred_region
    _
  $region37: #{residual_forward.1} parent=0 // pred_fallthru
    _
  // Predicated region
  $region38: #{residual_forward.1} parent=0 // pred_check
    _
  $region39: #{residual_forward.1} parent=0 // pred_check_branch
    %503 = sbr.rel (0) target = $region41
  $region40: #{residual_forward.1} parent=0 // pred_region
    _
  $region41: #{residual_forward.1} parent=0 // pred_fallthru
    _

</llo_original>
